<compile_context>
chip_gen: v6e
topology: v6e:2x2x1
jax: 0.10.0
libtpu: 0.0.40
codegen_flags: <defaults>
</compile_context>

<pallas_src>
from typing import NamedTuple

import jax
import jax.numpy as jnp
from jax.experimental import pallas as pl
from jax.experimental.pallas import tpu as pltpu


def _round_up(x, m):
    return ((x + m - 1) // m) * m


def _sublane_multiple(dtype):
    return {4: 8, 2: 16, 1: 32}.get(jnp.dtype(dtype).itemsize, 8)


def _largest_tile(dim_pad, target, base=128):
    """Largest multiple of `base` that divides dim_pad (a multiple of base) and is <= target."""
    n = dim_pad // base
    best = 1
    for d in range(1, n + 1):
        if n % d == 0 and d * base <= target:
            best = d
    return best * base


class QuantLinearParams(NamedTuple):
    """Weight/bias preprocessed once at model-load time."""
    w_kn: jax.Array        # (K_pad, N_pad): transposed, padded, cast
    b2d: jax.Array         # (1, N_pad) float32
    out_features: int
    in_features: int


def prepare_quant_linear_params(weight, bias=None, compute_dtype=None):
    """One-time preprocessing of the static nn.Linear parameters.

    weight: (out_features, in_features) -- PyTorch layout.
    compute_dtype: optional MXU operand dtype (e.g. jnp.bfloat16);
    accumulation inside the kernel is always float32.
    """
    N, K = weight.shape
    N_pad = _round_up(N, 128)
    K_pad = _round_up(K, 128)
    w_kn = weight.T                               # (K, N): canonical MXU RHS
    if (K_pad, N_pad) != (K, N):
        w_kn = jnp.pad(w_kn, ((0, K_pad - K), (0, N_pad - N)))
    if compute_dtype is not None:
        w_kn = w_kn.astype(compute_dtype)
    if bias is None:
        b2d = jnp.zeros((1, N_pad), jnp.float32)
    else:
        b2d = bias.astype(jnp.float32).reshape(1, N)
        if N_pad != N:
            b2d = jnp.pad(b2d, ((0, 0), (0, N_pad - N)))
    return QuantLinearParams(w_kn=w_kn, b2d=b2d, out_features=N, in_features=K)


# -------------------- kernels --------------------

def _linear_kernel_f32out(x_ref, w_ref, b_ref, o_ref):
    """float32 output: accumulate directly into the resident output tile."""
    k = pl.program_id(2)

    @pl.when(k == 0)
    def _init():
        o_ref[...] = jnp.broadcast_to(b_ref[...], o_ref.shape)

    o_ref[...] += jnp.dot(x_ref[...], w_ref[...],
                          preferred_element_type=jnp.float32)


def _linear_kernel_acc(x_ref, w_ref, b_ref, o_ref, acc_ref):
    """Narrow output dtype: float32 VMEM accumulator, cast in the epilogue."""
    k = pl.program_id(2)

    @pl.when(k == 0)
    def _init():
        acc_ref[...] = jnp.broadcast_to(b_ref[...], acc_ref.shape)

    acc_ref[...] += jnp.dot(x_ref[...], w_ref[...],
                            preferred_element_type=jnp.float32)

    @pl.when(k == pl.num_programs(2) - 1)
    def _finalize():
        o_ref[...] = acc_ref[...].astype(o_ref.dtype)


# -------------------- forward --------------------

def quant_linear_forward(x, params: QuantLinearParams, act_scaling_factor=None,
                         weight_scaling_factor=None, *,
                         tm=None, tn=None, tk=None):
    """Pallas TPU equivalent of ExportQuantLinear.forward.

    Returns (x @ W.T + b, act_scaling_factor).  weight_scaling_factor is
    unused, matching the PyTorch module.
    """
    del weight_scaling_factor  # intentionally unused (matches the module)

    out_dtype = x.dtype
    N, K = params.out_features, params.in_features
    K_pad, N_pad = params.w_kn.shape
    assert x.shape[-1] == K, "x last dim must equal in_features"

    x2d = x.reshape(-1, K)
    M = x2d.shape[0]

    # Activation operands follow the (pre-cast) weight dtype for the MXU.
    x_comp = x2d
    if (params.w_kn.dtype != x2d.dtype
            and jnp.issubdtype(params.w_kn.dtype, jnp.floating)):
        x_comp = x2d.astype(params.w_kn.dtype)

    x_dsize = jnp.dtype(x_comp.dtype).itemsize
    w_dsize = jnp.dtype(params.w_kn.dtype).itemsize
    out_dsize = jnp.dtype(out_dtype).itemsize
    f32_out = jnp.dtype(out_dtype) == jnp.dtype(jnp.float32)

    # ---- tile selection (generation-aware, VMEM-budgeted) ----
    sub = _sublane_multiple(x_comp.dtype)
    M_align = _round_up(M, sub)
    decode = M_align <= 128          # small-M / decode: weight streaming

    if decode:
        tm_eff = min(_round_up(tm, sub), M_align) if tm else M_align
        tn_target = tn or 1024
        tk_target = tk or 1024
    else:
        tm_eff = tm or min(512, M_align)       # maximize tm first
        tm_eff = min(_round_up(tm_eff, sub), M_align)
        tn_target = tn or 512
        tk_target = tk or 1024

    single_m = _round_up(M, tm_eff) == tm_eff
    if single_m and N_pad >= 256:
        # Keep >=2 blocks on a "parallel" axis so both v7x TCs get work.
        tn_target = min(tn_target, N_pad // 2)
    tn_eff = _largest_tile(N_pad, max(tn_target, 128))
    tk_eff = _largest_tile(K_pad, max(tk_target, 128))

    M_pad = _round_up(M, tm_eff)
    if (M_pad, K_pad) != (M, K):
        x_comp = jnp.pad(x_comp, ((0, M_pad - M), (0, K_pad - K)))

    grid = (M_pad // tm_eff, N_pad // tn_eff, K_pad // tk_eff)

    # Deeper weight buffering for HBM-bound decode (only if enough steps).
    deep_wbuf = decode and (grid[1] * grid[2] >= 3)
    w_bufs = 3 if deep_wbuf else 2

    w_spec_kwargs = dict(pipeline_mode=pl.Buffered(3)) if deep_wbuf else {}
    in_specs = [
        pl.BlockSpec((tm_eff, tk_eff), lambda i, j, k: (i, k)),
        pl.BlockSpec((tk_eff, tn_eff), lambda i, j, k: (k, j), **w_spec_kwargs),
        pl.BlockSpec((1, tn_eff), lambda i, j, k: (0, j)),
    ]
    out_spec = pl.BlockSpec((tm_eff, tn_eff), lambda i, j, k: (i, j))

    if f32_out:
        kernel = _linear_kernel_f32out
        scratch_shapes = []
    else:
        kernel = _linear_kernel_acc
        scratch_shapes = [pltpu.VMEM((tm_eff, tn_eff), jnp.float32)]

    # VMEM budget: double-buffered inputs/output (+ optional f32 acc).
    working = (2 * tm_eff * tk_eff * x_dsize
               + w_bufs * tk_eff * tn_eff * w_dsize
               + 2 * tn_eff * 4
               + 2 * tm_eff * tn_eff * out_dsize
               + (0 if f32_out else tm_eff * tn_eff * 4))
    vmem_limit = min(max(int(working * 1.5) + (4 << 20), 32 << 20), 48 << 20)

    cost = pl.CostEstimate(
        flops=2 * M_pad * N_pad * K_pad,
        transcendentals=0,
        bytes_accessed=int(M_pad * K_pad * x_dsize
                           + grid[0] * K_pad * N_pad * w_dsize
                           + N_pad * 4
                           + M_pad * N_pad * out_dsize))

    out_p = pl.pallas_call(
        kernel,
        out_shape=jax.ShapeDtypeStruct((M_pad, N_pad), out_dtype),
        grid_spec=pltpu.PrefetchScalarGridSpec(
            num_scalar_prefetch=0,
            grid=grid,
            in_specs=in_specs,
            out_specs=out_spec,
            scratch_shapes=scratch_shapes,
        ),
        compiler_params=pltpu.CompilerParams(
            dimension_semantics=("parallel", "parallel", "arbitrary"),
            vmem_limit_bytes=vmem_limit),
        cost_estimate=cost,
    )(x_comp, params.w_kn, params.b2d)

    y = out_p
    if (M_pad, N_pad) != (M, N):
        y = y[:M, :N]
    y = y.reshape(*x.shape[:-1], N)
    return y, act_scaling_factor


def quant_linear(x, weight, bias=None, act_scaling_factor=None,
                 weight_scaling_factor=None, *, compute_dtype=None, **tile_kwargs):
    """Convenience wrapper matching the PyTorch layout directly.

    For deployment, call prepare_quant_linear_params() once at load time and
    reuse the result; this wrapper re-prepares on every call.
    """
    params = prepare_quant_linear_params(weight, bias, compute_dtype)
    return quant_linear_forward(x, params, act_scaling_factor,
                                weight_scaling_factor, **tile_kwargs)


# -------------------- tests --------------------

if __name__ == "__main__":
    key = jax.random.PRNGKey(0)
    k1, k2, k3, k4, k5, k6, k7, k8, k9 = jax.random.split(key, 9)
    act_sf = jnp.float32(0.0125)

    # --- Test 1: small f32 layer (decode-shaped), exact nn.Linear semantics.
    b1, s1, in1, out1 = 2, 8, 32, 64
    x1 = jax.random.normal(k1, (b1, s1, in1), dtype=jnp.float32)
    w1 = jnp.round(jax.random.normal(k2, (out1, in1), dtype=jnp.float32) * 8.0)
    bias1 = jax.random.normal(k3, (out1,), dtype=jnp.float32)
    p1 = prepare_quant_linear_params(w1, bias1)
    y1, sf1 = quant_linear_forward(x1, p1, act_sf)
    jax.block_until_ready(y1)
    ref1 = x1 @ w1.T + bias1
    assert y1.shape == (b1, s1, out1)
    assert jnp.allclose(y1, ref1, atol=1e-4, rtol=1e-4)
    assert sf1 == act_sf

    # --- Test 2: decode shape with bf16 weight streaming (deep buffering path).
    b2, s2, in2, out2 = 1, 8, 2048, 512
    x2 = jax.random.normal(k4, (b2, s2, in2), dtype=jnp.float32)
    w2 = jnp.round(jax.random.normal(k5, (out2, in2), dtype=jnp.float32) * 4.0)
    bias2 = jax.random.normal(k6, (out2,), dtype=jnp.float32)
    p2 = prepare_quant_linear_params(w2, bias2, compute_dtype=jnp.bfloat16)
    y2, sf2 = quant_linear_forward(x2, p2, act_sf)
    jax.block_until_ready(y2)
    ref2 = (jnp.dot(x2.reshape(-1, in2).astype(jnp.bfloat16),
                    w2.T.astype(jnp.bfloat16),
                    preferred_element_type=jnp.float32)
            .reshape(b2, s2, out2) + bias2)
    assert y2.shape == (b2, s2, out2)
    assert jnp.allclose(y2, ref2, atol=0.5, rtol=5e-2)
    assert sf2 == act_sf

    # --- Test 3: larger-M f32 path (direct accumulate into output tile).
    b3, s3, in3, out3 = 2, 128, 512, 512
    x3 = jax.random.normal(k7, (b3, s3, in3), dtype=jnp.float32)
    w3 = jnp.round(jax.random.normal(k8, (out3, in3), dtype=jnp.float32) * 8.0)
    bias3 = jax.random.normal(k9, (out3,), dtype=jnp.float32)
    p3 = prepare_quant_linear_params(w3, bias3)
    y3, sf3 = quant_linear_forward(x3, p3, act_sf)
    jax.block_until_ready(y3)
    ref3 = x3 @ w3.T + bias3
    assert y3.shape == (b3, s3, out3)
    assert jnp.allclose(y3, ref3, atol=1e-2, rtol=1e-4)
    assert sf3 == act_sf

    # --- Test 4: bf16 activations/output (float32 VMEM accumulator path).
    x4 = x1[..., :32].astype(jnp.bfloat16)
    p4 = prepare_quant_linear_params(w1, bias1, compute_dtype=jnp.bfloat16)
    y4, sf4 = quant_linear_forward(x4, p4, act_sf)
    jax.block_until_ready(y4)
    ref4 = (x4.astype(jnp.float32) @ w1.T + bias1)
    assert y4.dtype == jnp.bfloat16
    assert jnp.allclose(y4.astype(jnp.float32), ref4, atol=2.0, rtol=5e-2)
    assert sf4 == act_sf

    print("KERNEL_OK")
</pallas_src>

<mosaic_0001>
module attributes {stable_mosaic.version = 11 : i64} {
  func.func @_linear_kernel_f32out(%arg0: i32, %arg1: i32, %arg2: i32, %arg3: memref<16x128xf32, #tpu.memory_space<vmem>>, %arg4: memref<128x128xf32, #tpu.memory_space<vmem>>, %arg5: memref<1x128xf32, #tpu.memory_space<vmem>>, %arg6: memref<16x128xf32, #tpu.memory_space<vmem>>) attributes {dimension_semantics = [#tpu.dimension_semantics<parallel>, #tpu.dimension_semantics<parallel>, #tpu.dimension_semantics<arbitrary>], iteration_bounds = array<i64: 1, 1, 1>, scalar_prefetch = 0 : i64, scratch_operands = 0 : i64, tpu.core_type = #tpu.core_type<tc>, window_params = [{transform_indices = @transform_0, window_bounds = array<i64: 16, 128>}, {transform_indices = @transform_1, window_bounds = array<i64: 128, 128>}, {transform_indices = @transform_2, window_bounds = array<i64: 1, 128>}, {transform_indices = @transform_3, window_bounds = array<i64: 16, 128>}]} {
    %c0_i32 = arith.constant 0 : i32
    %0 = arith.cmpi eq, %arg2, %c0_i32 : i32
    %1 = arith.extui %0 : i1 to i32
    %c0_i32_0 = arith.constant 0 : i32
    %2 = arith.cmpi ne, %1, %c0_i32_0 : i32
    scf.if %2 {
      %c0_8 = arith.constant 0 : index
      %c0_9 = arith.constant 0 : index
      %9 = vector.load %arg5[%c0_8, %c0_9] : memref<1x128xf32, #tpu.memory_space<vmem>>, vector<1x128xf32>
      %10 = vector.shape_cast %9 : vector<1x128xf32> to vector<1x128xf32>
      %11 = vector.broadcast %10 : vector<1x128xf32> to vector<16x128xf32>
      %c0_10 = arith.constant 0 : index
      %c0_11 = arith.constant 0 : index
      %12 = vector.load %arg6[%c0_10, %c0_11] : memref<16x128xf32, #tpu.memory_space<vmem>>, vector<16x128xf32>
      tpu.vector_store %arg6[%c0_10, %c0_11], %11 {strides = array<i32>} : memref<16x128xf32, #tpu.memory_space<vmem>>, vector<16x128xf32>,
    } else {
    }
    %c0 = arith.constant 0 : index
    %c0_1 = arith.constant 0 : index
    %3 = vector.load %arg6[%c0, %c0_1] : memref<16x128xf32, #tpu.memory_space<vmem>>, vector<16x128xf32>
    %c0_2 = arith.constant 0 : index
    %c0_3 = arith.constant 0 : index
    %4 = vector.load %arg3[%c0_2, %c0_3] : memref<16x128xf32, #tpu.memory_space<vmem>>, vector<16x128xf32>
    %c0_4 = arith.constant 0 : index
    %c0_5 = arith.constant 0 : index
    %5 = vector.load %arg4[%c0_4, %c0_5] : memref<128x128xf32, #tpu.memory_space<vmem>>, vector<128x128xf32>
    %cst = arith.constant dense<0.000000e+00> : vector<16x128xf32>
    %6 = tpu.matmul %4, %5, %cst {dimension_numbers = #tpu.dot_dimension_numbers<[1], [0], [0], [1], [0, 0, 1, 1], [], []>} : vector<16x128xf32>, vector<128x128xf32>, vector<16x128xf32> -> vector<16x128xf32>
    %7 = arith.addf %3, %6 : vector<16x128xf32>
    %c0_6 = arith.constant 0 : index
    %c0_7 = arith.constant 0 : index
    %8 = vector.load %arg6[%c0_6, %c0_7] : memref<16x128xf32, #tpu.memory_space<vmem>>, vector<16x128xf32>
    tpu.vector_store %arg6[%c0_6, %c0_7], %7 {strides = array<i32>} : memref<16x128xf32, #tpu.memory_space<vmem>>, vector<16x128xf32>,
    return
  }
  func.func @transform_0(%arg0: i32, %arg1: i32, %arg2: i32) -> (i32, i32) {
    %c0_i32 = arith.constant 0 : i32
    return %arg0, %arg2 : i32, i32
  }
  func.func @transform_1(%arg0: i32, %arg1: i32, %arg2: i32) -> (i32, i32) {
    %c0_i32 = arith.constant 0 : i32
    return %arg2, %arg1 : i32, i32
  }
  func.func @transform_2(%arg0: i32, %arg1: i32, %arg2: i32) -> (i32, i32) {
    %c0_i32 = arith.constant 0 : i32
    %c0_i32_0 = arith.constant 0 : i32
    return %c0_i32, %arg1 : i32, i32
  }
  func.func @transform_3(%arg0: i32, %arg1: i32, %arg2: i32) -> (i32, i32) {
    %c0_i32 = arith.constant 0 : i32
    return %arg0, %arg1 : i32, i32
  }
}

</mosaic_0001>

<llo_original>
// kernel: tpu_custom_call.1
$region0: #{tpu_custom_call.1}
  #allocation0 [shape = 'u32[]', space=smem, size = 0x4, offset = 0x4, fixed_abs, tag = 'smem constant byte address 0x4 - core index']
  #allocation1 [shape = 'u32[144,128]{1,0:T(1,128)}', space=vmem, size = 0x12000, scoped, tag = 'internal scratch']
  %s0 = inlined_call_operand.hbm [shape: f32[16,128], index: 0, kind: input, shape index: {}]
  %s1 = inlined_call_operand.hbm [shape: f32[128,128], index: 1, kind: input, shape index: {}]
  %s2 = inlined_call_operand.vmem [shape: f32[1,128], index: 2, kind: input, shape index: {}]
  %s3 = inlined_call_operand.hbm [shape: f32[16,128], index: 3, kind: output, shape index: {}]
  %s4 = sld [smem:[#allocation0]]
  $region34: #{tpu_custom_call.1} parent=0
    _
  %s6 = ssub.s32 1, %s4
  %s7 = scalar_select 0, %s6, %s4
  $region1: #{tpu_custom_call.1} parent=0
    #allocation2 [shape = 'u8[8192]{0}', space=vmem, size = 0x2000, scoped, tag = 'input window, operand 0, single buffered']
    #allocation3 [shape = 's32[1]{0}', space=sflag, size = 0x4, scoped, tag = 'scoped memory for tpu_custom_call.1']
    #allocation4 [shape = 's32[1]{0}', space=sflag, size = 0x4, scoped, tag = 'scoped memory for tpu_custom_call.1']
    #allocation5 [shape = 'u8[65536]{0}', space=vmem, size = 0x10000, scoped, tag = 'input window, operand 1, single buffered']
    #allocation6 [shape = 's32[1]{0}', space=sflag, size = 0x4, scoped, tag = 'scoped memory for tpu_custom_call.1']
    #allocation7 [shape = 'u8[8192]{0}', space=vmem, size = 0x2000, scoped, tag = 'output window, operand 0, single buffered']
    %8 = vsyncpa [#allocation3], 0
    %9 = vsyncpa [#allocation6], 0
    %10 = vsyncpa [#allocation4], 0
    // Predicated region
    $region2: #{tpu_custom_call.1} parent=1 // pred_check
      _
    $region3: #{tpu_custom_call.1} parent=1 // pred_check_branch
      %12 = sbr.rel (0) target = $region5
    $region4: #{tpu_custom_call.1} parent=1 // pred_region
      %s14 = ssub.s32 256, 256
      %15 = vsyncadd [#allocation3], %s14
      %s16 = sshll.u32 [#allocation2], 4
      %s17 = int_to_ptr.vmem [resolvable:$true] %s16
      %22 = dma.hbm_to_vmem [thread:$0]  %s0, 256, %s17, [#allocation3], 128, 128, 8
    $region5: #{tpu_custom_call.1} parent=1 // pred_fallthru
      _
    // Predicated region
    $region6: #{tpu_custom_call.1} parent=1 // pred_check
      _
    $region7: #{tpu_custom_call.1} parent=1 // pred_check_branch
      %24 = sbr.rel (0) target = $region9
    $region8: #{tpu_custom_call.1} parent=1 // pred_region
      %s26 = ssub.s32 2048, 2048
      %27 = vsyncadd [#allocation6], %s26
      %s28 = sshll.u32 [#allocation5], 4
      %s29 = int_to_ptr.vmem [resolvable:$true] %s28
      %34 = dma.hbm_to_vmem [thread:$0]  %s1, 2048, %s29, [#allocation6], 128, 128, 8
    $region9: #{tpu_custom_call.1} parent=1 // pred_fallthru
      _
    // Predicated region
    $region10: #{tpu_custom_call.1} parent=1 // pred_check
      _
    $region11: #{tpu_custom_call.1} parent=1 // pred_check_branch
      %36 = sbr.rel (0) target = $region13
    $region12: #{tpu_custom_call.1} parent=1 // pred_region
      _
    $region13: #{tpu_custom_call.1} parent=1 // pred_fallthru
      _
    // Predicated region
    $region14: #{tpu_custom_call.1} parent=1 // pred_check
      _
    $region15: #{tpu_custom_call.1} parent=1 // pred_check_branch
      %38 = sbr.rel (0) target = $region17
    $region16: #{tpu_custom_call.1} parent=1 // pred_region
      %39 = dma.done [#allocation3], 256
    $region17: #{tpu_custom_call.1} parent=1 // pred_fallthru
      _
    // Predicated region
    $region18: #{tpu_custom_call.1} parent=1 // pred_check
      _
    $region19: #{tpu_custom_call.1} parent=1 // pred_check_branch
      %41 = sbr.rel (0) target = $region21
    $region20: #{tpu_custom_call.1} parent=1 // pred_region
      %42 = dma.done [#allocation6], 2048
    $region21: #{tpu_custom_call.1} parent=1 // pred_fallthru
      _
    %p43 = scmp.eq.s32.totalorder 0, 0
    // Predicated region
    $region22: #{tpu_custom_call.1} parent=1 // pred_check
      %p44 = pneg %p43
    $region23: #{tpu_custom_call.1} parent=1 // pred_check_branch
      %46 = sbr.rel (%p44) target = $region25
    $region24: #{tpu_custom_call.1} parent=1 // pred_region
      %v47 = vld [vmem:[%s2] sm:$0x1]
      %v49 = vlaneseq
      %v50 = vshrl.u32 %v49, 7
      %v51 = vsub.s32 0, %v50
      %v52 = vrot.slane %v47, %v51
      %54 = vst [vmem:[#allocation7] sm:$0xff] %v52
      %55 = vst [vmem:[#allocation7 + $0x8] sm:$0xff] %v52
    $region25: #{tpu_custom_call.1} parent=1 // pred_fallthru
      _
    %v56 = vld [vmem:[#allocation7] sm:$0xff]
    %v57 = vld [vmem:[#allocation7 + $0x8] sm:$0xff]
    %v58 = vld [vmem:[#allocation2] sm:$0xff]
    %v59 = vld [vmem:[#allocation2 + $0x8] sm:$0xff]
    %v60 = vld [vmem:[#allocation5] sm:$0xff]
    %v61 = vld [vmem:[#allocation5 + $0x8] sm:$0xff]
    %v62 = vld [vmem:[#allocation5 + $0x10] sm:$0xff]
    %v63 = vld [vmem:[#allocation5 + $0x18] sm:$0xff]
    %v64 = vld [vmem:[#allocation5 + $0x20] sm:$0xff]
    %v65 = vld [vmem:[#allocation5 + $0x28] sm:$0xff]
    %v66 = vld [vmem:[#allocation5 + $0x30] sm:$0xff]
    %v67 = vld [vmem:[#allocation5 + $0x38] sm:$0xff]
    %v68 = vld [vmem:[#allocation5 + $0x40] sm:$0xff]
    %v69 = vld [vmem:[#allocation5 + $0x48] sm:$0xff]
    %v70 = vld [vmem:[#allocation5 + $0x50] sm:$0xff]
    %v71 = vld [vmem:[#allocation5 + $0x58] sm:$0xff]
    %v72 = vld [vmem:[#allocation5 + $0x60] sm:$0xff]
    %v73 = vld [vmem:[#allocation5 + $0x68] sm:$0xff]
    %v74 = vld [vmem:[#allocation5 + $0x70] sm:$0xff]
    %v75 = vld [vmem:[#allocation5 + $0x78] sm:$0xff]
    %76 = vmatprep.subr.mxu0 0.0
    %77 = vmatpush1.msra.mxu0 %v75
    %78 = vmatprep.subr.mxu0 0.0
    %79 = vmatpush1.msra.mxu0 %v74
    %80 = vmatprep.subr.mxu0 0.0
    %81 = vmatpush1.msra.mxu0 %v73
    %82 = vmatprep.subr.mxu0 0.0
    %83 = vmatpush1.msra.mxu0 %v72
    %84 = vmatprep.subr.mxu0 0.0
    %85 = vmatpush1.msra.mxu0 %v71
    %86 = vmatprep.subr.mxu0 0.0
    %87 = vmatpush1.msra.mxu0 %v70
    %88 = vmatprep.subr.mxu0 0.0
    %89 = vmatpush1.msra.mxu0 %v69
    %90 = vmatprep.subr.mxu0 0.0
    %91 = vmatpush1.msra.mxu0 %v68
    %92 = vmatprep.subr.mxu0 0.0
    %93 = vmatpush1.msra.mxu0 %v67
    %94 = vmatprep.subr.mxu0 0.0
    %95 = vmatpush1.msra.mxu0 %v66
    %96 = vmatprep.subr.mxu0 0.0
    %97 = vmatpush1.msra.mxu0 %v65
    %98 = vmatprep.subr.mxu0 0.0
    %99 = vmatpush1.msra.mxu0 %v64
    %100 = vmatprep.subr.mxu0 0.0
    %101 = vmatpush1.msra.mxu0 %v63
    %102 = vmatprep.subr.mxu0 0.0
    %103 = vmatpush1.msra.mxu0 %v62
    %104 = vmatprep.subr.mxu0 0.0
    %105 = vmatpush1.msra.mxu0 %v61
    %106 = vmatprep.subr.mxu0 0.0
    %107 = vmatpush1.msra.mxu0 %v60
    %108 = vmatprep.subr.mxu0 0.0
    %109 = vmatpush2.msra.mxu0 0.0
    %110 = vmatprep.subr.mxu0 0.0
    %111 = vmatpush2.msra.mxu0 0.0
    %112 = vmatprep.subr.mxu0 0.0
    %113 = vmatpush2.msra.mxu0 0.0
    %114 = vmatprep.subr.mxu0 0.0
    %115 = vmatpush2.msra.mxu0 0.0
    %116 = vmatprep.subr.mxu0 0.0
    %117 = vmatpush2.msra.mxu0 0.0
    %118 = vmatprep.subr.mxu0 0.0
    %119 = vmatpush2.msra.mxu0 0.0
    %120 = vmatprep.subr.mxu0 0.0
    %121 = vmatpush2.msra.mxu0 0.0
    %122 = vmatprep.subr.mxu0 0.0
    %123 = vmatpush2.msra.mxu0 0.0
    %124 = vmatprep.subr.mxu0 0.0
    %125 = vmatpush2.msra.mxu0 0.0
    %126 = vmatprep.subr.mxu0 0.0
    %127 = vmatpush2.msra.mxu0 0.0
    %128 = vmatprep.subr.mxu0 0.0
    %129 = vmatpush2.msra.mxu0 0.0
    %130 = vmatprep.subr.mxu0 0.0
    %131 = vmatpush2.msra.mxu0 0.0
    %132 = vmatprep.subr.mxu0 0.0
    %133 = vmatpush2.msra.mxu0 0.0
    %134 = vmatprep.subr.mxu0 0.0
    %135 = vmatpush2.msra.mxu0 0.0
    %136 = vmatprep.subr.mxu0 0.0
    %137 = vmatpush2.msra.mxu0 0.0
    %138 = vmatprep.subr.mxu0 0.0
    %139 = vmatpush2.msra.mxu0 0.0
    %140 = vmatprep.mubr.f32.mxu0 0.0
    %141 = vmatmul.mubr.f32.gmra.mxu0 %v58
    %v142 = vpop.f32.mrf.mxu0
    %v143 = vadd.f32 0.0, %v142
    %v144 = vpop.f32.mrf.mxu0
    %145 = vmatprep.mubr.f32.mxu0 0.0
    %146 = vmatmul.mubr.f32.gmra.mxu0 %v59
    %v147 = vpop.f32.mrf.mxu0
    %v148 = vadd.f32 0.0, %v147
    %v149 = vpop.f32.mrf.mxu0
    %150 = vdwg.mxu0
    %v151 = vadd.f32 %v56, %v143
    %v152 = vadd.f32 %v57, %v148
    %153 = vst [vmem:[#allocation7] sm:$0xff] %v151
    %154 = vst [vmem:[#allocation7 + $0x8] sm:$0xff] %v152
    // Predicated region
    $region26: #{tpu_custom_call.1} parent=1 // pred_check
      _
    $region27: #{tpu_custom_call.1} parent=1 // pred_check_branch
      %156 = sbr.rel (0) target = $region29
    $region28: #{tpu_custom_call.1} parent=1 // pred_region
      %s158 = ssub.s32 256, 256
      %159 = vsyncadd [#allocation4], %s158
      %s160 = sshll.u32 [#allocation7], 4
      %s161 = int_to_ptr.vmem [resolvable:$true] %s160
      %166 = dma.vmem_to_hbm [thread:$0]  %s161, 256, %s3, [#allocation4], 128, 128, 8
    $region29: #{tpu_custom_call.1} parent=1 // pred_fallthru
      _
    // Predicated region
    $region30: #{tpu_custom_call.1} parent=1 // pred_check
      _
    $region31: #{tpu_custom_call.1} parent=1 // pred_check_branch
      %168 = sbr.rel (0) target = $region33
    $region32: #{tpu_custom_call.1} parent=1 // pred_region
      %169 = dma.done [#allocation4], 256
    $region33: #{tpu_custom_call.1} parent=1 // pred_fallthru
      _
    %170 = vsyncpa [#allocation3], 1
    %171 = vsyncpa [#allocation6], 1
    %172 = vsyncpa [#allocation4], 1

</llo_original>
